<compile_context>
chip_gen: v7x
topology: tpu7x:2x2x1
jax: 0.10.0
libtpu: 0.0.40
codegen_flags: <defaults>
</compile_context>

<pallas_src>
import functools

import jax
import jax.numpy as jnp
from jax import lax
from jax.experimental import pallas as pl
from jax.experimental.pallas import tpu as pltpu


def soft_prompt_kernel(tok_ref, embed_ref, prompt_ref, out_ref, acc_ref, *, s_text, tv):
    """Grid = (B, V // tv).  Axis 0: batch (parallel); axis 1: vocab tiles (reduction).

    tok_ref:    (1, 1, s_text) int32   token ids of the text part for batch element b
    embed_ref:  (tv, D)                one vocab tile of the embedding table
    prompt_ref: (P, D)                 concatenated soft-prompt parameters
    out_ref:    (1, s_text + P, D)     output tile for batch element b
    acc_ref:    (s_text, D) float32    gather accumulator (VMEM scratch)
    """
    v = pl.program_id(1)
    nv = pl.num_programs(1)

    @pl.when(v == 0)
    def _():
        acc_ref[...] = jnp.zeros_like(acc_ref)

    # Vectorized embedding lookup as a one-hot matmul on the MXU.
    # onehot_t[r, s] == 1  iff  token s has id (v * tv + r).
    ids = tok_ref[0]                                                     # (1, s_text) int32
    row_ids = lax.broadcasted_iota(jnp.int32, (tv, s_text), 0) + v * tv  # (tv, s_text)
    onehot_t = (row_ids == jnp.broadcast_to(ids, (tv, s_text))).astype(embed_ref.dtype)
    # (tv, s_text)^T @ (tv, D) -> (s_text, D); contraction over the vocab tile.
    acc_ref[...] += lax.dot_general(
        onehot_t,
        embed_ref[...],
        dimension_numbers=(((0,), (0,)), ((), ())),
        preferred_element_type=jnp.float32,
    )

    @pl.when(v == nv - 1)
    def _():
        # Two full-slab stores: gathered text embeddings, then the batch-broadcast prompt.
        out_ref[0, :s_text, :] = acc_ref[...].astype(out_ref.dtype)
        out_ref[0, s_text:, :] = prompt_ref[...].astype(out_ref.dtype)


def _vocab_tile(v, cap=512):
    """Largest vocab tile <= cap that divides V and is a multiple of 8 (else V itself)."""
    if v <= cap:
        return v
    for t in range(cap, 7, -8):
        if v % t == 0:
            return t
    return v


def soft_prompt_forward(tokens, embed_w, prompt_embed, n_prompt):
    """tokens: (B, S_tok) int; embed_w: (V, D); prompt_embed: (P, D)."""
    B, S_tok = tokens.shape
    V, D = embed_w.shape
    P = prompt_embed.shape[0]
    S_text = S_tok - n_prompt
    S_out = S_text + P

    # Explicitly keep the prompt in the same dtype as the embedding table.
    prompt_embed = prompt_embed.astype(embed_w.dtype)
    # Only the text token ids feed the kernel (trailing n_prompt placeholders are
    # replaced by the learned prompt).  Shape (B, 1, S_text) so the per-batch block
    # covers the full last-two dims (keeps the (8,128) BlockSpec rules trivially).
    tok_text = tokens[:, :S_text].astype(jnp.int32).reshape(B, 1, S_text)

    tv = _vocab_tile(V)
    nv = V // tv

    kernel = functools.partial(soft_prompt_kernel, s_text=S_text, tv=tv)

    grid_spec = pltpu.PrefetchScalarGridSpec(
        num_scalar_prefetch=0,
        grid=(B, nv),  # batch (parallel) outer, vocab-tile reduction last
        in_specs=[
            pl.BlockSpec((1, 1, S_text), lambda b, v: (b, 0, 0)),  # token ids
            pl.BlockSpec((tv, D), lambda b, v: (v, 0)),            # vocab tile of table
            pl.BlockSpec((P, D), lambda b, v: (0, 0)),             # prompt (constant block)
        ],
        out_specs=pl.BlockSpec((1, S_out, D), lambda b, v: (b, 0, 0)),
        scratch_shapes=[pltpu.VMEM((S_text, D), jnp.float32)],
    )

    itemsize = jnp.dtype(embed_w.dtype).itemsize
    est_vmem = (
        2 * tv * D * itemsize        # embed tiles (double-buffered)
        + 2 * P * D * itemsize       # prompt
        + 2 * S_text * 4             # token ids
        + 2 * S_out * D * itemsize   # output tile (double-buffered)
        + S_text * D * 4             # accumulator scratch
    )
    vmem_limit = int(min(max(2 * est_vmem, 16 * 1024 * 1024), 100 * 1024 * 1024))

    return pl.pallas_call(
        kernel,
        out_shape=jax.ShapeDtypeStruct((B, S_out, D), embed_w.dtype),
        grid_spec=grid_spec,
        compiler_params=pltpu.CompilerParams(
            dimension_semantics=("parallel", "arbitrary"),
            vmem_limit_bytes=vmem_limit,
        ),
    )(tok_text, embed_w, prompt_embed)


def build_prompt_params(key, embed_w, n_prompt, random_range=0.1):
    """Deterministic stand-in for build_event_repr / sep_event_tensor:
    each prompt row is either an average of a few embedding rows or a
    uniform(-r, r) vector; the last row mimics plm_embed.weight[102 % V]."""
    V, D = embed_w.shape
    rows = []
    for i in range(n_prompt - 1):
        if i % 3 == 2:
            # "unk token (id==100)" branch -> uniform init
            key, sub = jax.random.split(key)
            rows.append(jax.random.uniform(sub, (D,), jnp.float32,
                                           -random_range, random_range))
        else:
            ids = jnp.array([(2 * i + 1) % V, (3 * i + 5) % V], dtype=jnp.int32)
            rows.append(jnp.mean(embed_w[ids], axis=0))
    rows.append(embed_w[102 % V])  # [SEP]-like row
    return jnp.stack(rows, axis=0)  # (n_prompt, D)


if __name__ == "__main__":
    key = jax.random.PRNGKey(0)
    k_embed, k_tok, k_prompt = jax.random.split(key, 3)

    # Small synthetic shapes consistent with the module's forward.
    B = 2          # batch
    S_TOK = 16     # full token sequence length (includes n_prompt placeholders)
    N_PROMPT = 8   # PROMPT_SIZE
    V = 64         # vocab size of plm_embed
    D = 128        # embed_size (lane-aligned)

    embed_w = jax.random.normal(k_embed, (V, D), jnp.float32) * 0.02
    tokens = jax.random.randint(k_tok, (B, S_TOK), 0, V, jnp.int32)
    prompt_embed = build_prompt_params(k_prompt, embed_w, N_PROMPT)  # (P, D)

    out = soft_prompt_forward(tokens, embed_w, prompt_embed, N_PROMPT)
    out = jax.block_until_ready(out)

    # Pure-JAX reference of the PyTorch forward.
    ref_text = jnp.take(embed_w, tokens[:, :-N_PROMPT], axis=0)          # (B, S_text, D)
    ref_prompt = jnp.broadcast_to(prompt_embed[None].astype(embed_w.dtype),
                                  (B,) + prompt_embed.shape)
    ref = jnp.concatenate([ref_text, ref_prompt], axis=1)                # (B, S_tok, D)

    assert out.shape == (B, S_TOK, D), out.shape
    assert jnp.allclose(out, ref, atol=1e-6, rtol=1e-6)
    print("KERNEL_OK")
</pallas_src>

<mosaic_0001>
module attributes {stable_mosaic.version = 11 : i64} {
  func.func @soft_prompt_kernel(%arg0: i32, %arg1: i32, %arg2: memref<1x1x8xi32, #tpu.memory_space<vmem>>, %arg3: memref<64x128xf32, #tpu.memory_space<vmem>>, %arg4: memref<8x128xf32, #tpu.memory_space<vmem>>, %arg5: memref<1x16x128xf32, #tpu.memory_space<vmem>>, %arg6: memref<8x128xf32, #tpu.memory_space<vmem>>) attributes {dimension_semantics = [#tpu.dimension_semantics<parallel>, #tpu.dimension_semantics<arbitrary>], iteration_bounds = array<i64: 2, 1>, scalar_prefetch = 0 : i64, scratch_operands = 1 : i64, tpu.core_type = #tpu.core_type<tc>, window_params = [{transform_indices = @transform_0, window_bounds = array<i64: 1, 1, 8>}, {transform_indices = @transform_1, window_bounds = array<i64: 64, 128>}, {pipeline_mode = #tpu.pipeline_mode<synchronous>, transform_indices = @transform_2, window_bounds = array<i64: 8, 128>}, {transform_indices = @transform_3, window_bounds = array<i64: 1, 16, 128>}]} {
    %c0_i32 = arith.constant 0 : i32
    %0 = arith.cmpi eq, %arg1, %c0_i32 : i32
    %1 = arith.extui %0 : i1 to i32
    %c0_i32_0 = arith.constant 0 : i32
    %2 = arith.cmpi ne, %1, %c0_i32_0 : i32
    scf.if %2 {
      %cst_11 = arith.constant 0.000000e+00 : f32
      %22 = vector.broadcast %cst_11 : f32 to vector<8x128xf32>
      %c0_12 = arith.constant 0 : index
      %c0_13 = arith.constant 0 : index
      %23 = vector.load %arg6[%c0_12, %c0_13] : memref<8x128xf32, #tpu.memory_space<vmem>>, vector<8x128xf32>
      tpu.vector_store %arg6[%c0_12, %c0_13], %22 {strides = array<i32>} : memref<8x128xf32, #tpu.memory_space<vmem>>, vector<8x128xf32>,
    } else {
    }
    %c0 = arith.constant 0 : index
    %c0_1 = arith.constant 0 : index
    %c0_2 = arith.constant 0 : index
    %3 = vector.load %arg2[%c0, %c0_1, %c0_2] : memref<1x1x8xi32, #tpu.memory_space<vmem>>, vector<1x1x8xi32>
    %4 = vector.shape_cast %3 : vector<1x1x8xi32> to vector<1x8xi32>
    %5 = tpu.iota {dimensions = array<i32: 0>} : vector<64x8xi32>
    %c64_i32 = arith.constant 64 : i32
    %6 = arith.muli %arg1, %c64_i32 : i32
    %7 = vector.broadcast %6 : i32 to vector<64x8xi32>
    %8 = arith.addi %5, %7 : vector<64x8xi32>
    %9 = vector.shape_cast %4 : vector<1x8xi32> to vector<1x8xi32>
    %10 = vector.broadcast %9 : vector<1x8xi32> to vector<64x8xi32>
    %11 = arith.cmpi eq, %8, %10 : vector<64x8xi32>
    %12 = arith.extui %11 : vector<64x8xi1> to vector<64x8xi32>
    %13 = arith.sitofp %12 : vector<64x8xi32> to vector<64x8xf32>
    %c0_3 = arith.constant 0 : index
    %c0_4 = arith.constant 0 : index
    %14 = vector.load %arg6[%c0_3, %c0_4] : memref<8x128xf32, #tpu.memory_space<vmem>>, vector<8x128xf32>
    %c0_5 = arith.constant 0 : index
    %c0_6 = arith.constant 0 : index
    %15 = vector.load %arg3[%c0_5, %c0_6] : memref<64x128xf32, #tpu.memory_space<vmem>>, vector<64x128xf32>
    %cst = arith.constant dense<0.000000e+00> : vector<8x128xf32>
    %16 = tpu.matmul %13, %15, %cst {dimension_numbers = #tpu.dot_dimension_numbers<[0], [0], [1], [1], [0, 1, 1, 1], [], []>} : vector<64x8xf32>, vector<64x128xf32>, vector<8x128xf32> -> vector<8x128xf32>
    %17 = arith.addf %14, %16 : vector<8x128xf32>
    %c0_7 = arith.constant 0 : index
    %c0_8 = arith.constant 0 : index
    %18 = vector.load %arg6[%c0_7, %c0_8] : memref<8x128xf32, #tpu.memory_space<vmem>>, vector<8x128xf32>
    tpu.vector_store %arg6[%c0_7, %c0_8], %17 {strides = array<i32>} : memref<8x128xf32, #tpu.memory_space<vmem>>, vector<8x128xf32>,
    %c0_i32_9 = arith.constant 0 : i32
    %19 = arith.cmpi eq, %arg1, %c0_i32_9 : i32
    %20 = arith.extui %19 : i1 to i32
    %c0_i32_10 = arith.constant 0 : i32
    %21 = arith.cmpi ne, %20, %c0_i32_10 : i32
    scf.if %21 {
      %c0_11 = arith.constant 0 : index
      %c0_12 = arith.constant 0 : index
      %22 = vector.load %arg6[%c0_11, %c0_12] : memref<8x128xf32, #tpu.memory_space<vmem>>, vector<8x128xf32>
      %c0_13 = arith.constant 0 : index
      %c0_14 = arith.constant 0 : index
      %c0_15 = arith.constant 0 : index
      %23 = vector.load %arg5[%c0_13, %c0_14, %c0_15] : memref<1x16x128xf32, #tpu.memory_space<vmem>>, vector<1x8x128xf32>
      %24 = vector.shape_cast %23 : vector<1x8x128xf32> to vector<8x128xf32>
      %25 = vector.shape_cast %22 : vector<8x128xf32> to vector<1x8x128xf32>
      tpu.vector_store %arg5[%c0_13, %c0_14, %c0_15], %25 {strides = array<i32>} : memref<1x16x128xf32, #tpu.memory_space<vmem>>, vector<1x8x128xf32>,
      %c0_16 = arith.constant 0 : index
      %c0_17 = arith.constant 0 : index
      %26 = vector.load %arg4[%c0_16, %c0_17] : memref<8x128xf32, #tpu.memory_space<vmem>>, vector<8x128xf32>
      %c0_18 = arith.constant 0 : index
      %c8 = arith.constant 8 : index
      %c0_19 = arith.constant 0 : index
      %27 = vector.load %arg5[%c0_18, %c8, %c0_19] : memref<1x16x128xf32, #tpu.memory_space<vmem>>, vector<1x8x128xf32>
      %28 = vector.shape_cast %27 : vector<1x8x128xf32> to vector<8x128xf32>
      %29 = vector.shape_cast %26 : vector<8x128xf32> to vector<1x8x128xf32>
      tpu.vector_store %arg5[%c0_18, %c8, %c0_19], %29 {strides = array<i32>} : memref<1x16x128xf32, #tpu.memory_space<vmem>>, vector<1x8x128xf32>,
    } else {
    }
    return
  }
  func.func @transform_0(%arg0: i32, %arg1: i32) -> (i32, i32, i32) {
    %c0_i32 = arith.constant 0 : i32
    %c0_i32_0 = arith.constant 0 : i32
    %c0_i32_1 = arith.constant 0 : i32
    return %arg0, %c0_i32, %c0_i32_0 : i32, i32, i32
  }
  func.func @transform_1(%arg0: i32, %arg1: i32) -> (i32, i32) {
    %c0_i32 = arith.constant 0 : i32
    %c0_i32_0 = arith.constant 0 : i32
    return %arg1, %c0_i32 : i32, i32
  }
  func.func @transform_2(%arg0: i32, %arg1: i32) -> (i32, i32) {
    %c0_i32 = arith.constant 0 : i32
    %c0_i32_0 = arith.constant 0 : i32
    %c0_i32_1 = arith.constant 0 : i32
    return %c0_i32, %c0_i32_0 : i32, i32
  }
  func.func @transform_3(%arg0: i32, %arg1: i32) -> (i32, i32, i32) {
    %c0_i32 = arith.constant 0 : i32
    %c0_i32_0 = arith.constant 0 : i32
    %c0_i32_1 = arith.constant 0 : i32
    return %arg0, %c0_i32, %c0_i32_0 : i32, i32, i32
  }
}

</mosaic_0001>

<llo_original>
// kernel: tpu_custom_call.1
$region0: #{tpu_custom_call.1}
  #allocation0 [shape = 'u32[]', space=smem, size = 0x4, offset = 0x4, fixed_abs, tag = 'smem constant byte address 0x4 - core index']
  #allocation1 [shape = 'u32[144,128]{1,0:T(1,128)}', space=vmem, size = 0x12000, scoped, tag = 'internal scratch']
  #allocation2 [shape = 'f32[8,128]{1,0:T(8,128)}', space=vmem, size = 0x1000, scoped, tag = 'scratch operand']
  %s0 = inlined_call_operand.hbm [shape: s32[2,1,8], index: 0, kind: input, shape index: {}]
  %s1 = inlined_call_operand.hbm [shape: f32[64,128], index: 1, kind: input, shape index: {}]
  %s2 = inlined_call_operand.hbm [shape: f32[8,128], index: 2, kind: input, shape index: {}]
  %s3 = inlined_call_operand.hbm [shape: f32[2,16,128], index: 3, kind: output, shape index: {}]
  %s4 = sld [smem:[#allocation0]]
  $region65: #{tpu_custom_call.1} parent=0
    _
  %s6 = ssub.s32 1, %s4
  %s7 = scalar_select 0, %s6, %s4
  $region1: #{tpu_custom_call.1} parent=0
    #allocation3 [shape = 'u8[1024]{0}', space=vmem, size = 0x400, scoped, tag = 'input window, operand 0']
    #allocation4 [shape = 's32[2]{0}', space=sflag, size = 0x8, scoped, tag = 'scoped memory for tpu_custom_call.1']
    #allocation5 [shape = 's32[2]{0}', space=sflag, size = 0x8, scoped, tag = 'scoped memory for tpu_custom_call.1']
    #allocation6 [shape = 'u8[32768]{0}', space=vmem, size = 0x8000, scoped, tag = 'input window, operand 1, single buffered']
    #allocation7 [shape = 's32[1]{0}', space=sflag, size = 0x4, scoped, tag = 'scoped memory for tpu_custom_call.1']
    #allocation8 [shape = 'u8[4096]{0}', space=vmem, size = 0x1000, scoped, tag = 'input window, operand 2, single buffered']
    #allocation9 [shape = 'u8[16384]{0}', space=vmem, size = 0x4000, scoped, tag = 'output window, operand 0']
    %8 = vsyncpa [#allocation4], 0
    %s9 = scalar_lea.sflag [#allocation4], 1
    %10 = vsyncpa %s9, 0
    %11 = vsyncpa [#allocation7], 0
    %12 = vsyncpa [#allocation5], 0
    %s13 = scalar_lea.sflag [#allocation5], 1
    %14 = vsyncpa %s13, 0
    loop: start=0, step=1, limit=4
    $region2: #{tpu_custom_call.1} parent=1 // loop_pre_header
      _
    $region3: #{tpu_custom_call.1} parent=1 // loop_header
      %s16 = sphi 0, %s20
      %p17 = scmp.ge.s32.totalorder %s16, 4
      %s23 = sphi 0, %s35
      %s24 = sphi 0, %s31
      %s25 = sphi 0, %s23
      %s26 = sphi 0, %s24
      %s27 = sphi 0, %s25
      %s28 = sphi 0, %s26
      %s38 = sphi 0, %s40
      %s41 = sphi 0, %s38
      %s42 = sphi 0, %s41
      %s58 = sphi 0, %s42
      %s64 = sphi 0, %s66
      %s67 = sphi 0, %s64
      %s68 = sphi 0, %s67
      %s84 = sphi 0, %s68
      %s88 = sphi 0, %s88
      %s90 = sphi 0, %s88
      %s91 = sphi 0, %s90
      %s105 = sphi 0, %s91
      %s111 = sphi 0, %s113
      %s114 = sphi 0, %s111
      %s115 = sphi 0, %s114
      %s131 = sphi 0, %s115
    $region4: #{tpu_custom_call.1} parent=1 // loop_header_branch
      %19 = sbr.rel (%p17) target = $region8
    $region5: #{tpu_custom_call.1} parent=1 // loop_body
      %s21 = ssub.s32 %s16, 1
      %s22 = ssub.s32 %s16, 2
      %s29 = sadd.s32 1, %s24
      %p30 = scmp.ge.s32.totalorder %s29, 1
      %s31 = scalar_select %p30, 0, %s29
      %s32 = sadd.s32 1, %s23
      %s33 = scalar_select %p30, %s32, %s23
      %p34 = scmp.ge.s32.totalorder %s33, 2
      %s35 = scalar_select %p34, 0, %s33
      %s36 = ssub.s32 %s23, %s35
      %p37 = scmp.eq.s32.totalorder %s36, 0
      %s39 = sadd.s32 %s38, 1
      %s40 = scalar_select %p37, %s38, %s39
      %p43 = pneg %p37
      %p44 = scmp.eq.s32.totalorder %s16, 1
      %p45 = por %p43, %p44
      %p46 = scmp.ne.s32.totalorder %s38, %s41
      %p47 = scmp.eq.s32.totalorder %s16, 0
      %p48 = por %p46, %p47
      %p49 = scmp.ne.s32.totalorder %s38, %s41
      %p50 = scmp.eq.s32.totalorder %s21, 1
      %p51 = por %p49, %p50
      %p52 = scmp.ne.s32.totalorder %s41, %s42
      %p53 = scmp.eq.s32.totalorder %s21, 0
      %p54 = por %p52, %p53
      %p55 = scmp.ne.s32.totalorder %s41, %s42
      %p56 = scmp.eq.s32.totalorder %s22, 1
      %p57 = por %p55, %p56
      %p59 = scmp.ne.s32.totalorder %s42, %s58
      %p60 = scmp.eq.s32.totalorder %s22, 0
      %p61 = por %p59, %p60
      %s62 = ssub.s32 %s24, %s31
      %p63 = scmp.eq.s32.totalorder %s62, 0
      %s65 = sadd.s32 %s64, 1
      %s66 = scalar_select %p63, %s64, %s65
      %p69 = pneg %p63
      %p70 = scmp.eq.s32.totalorder %s16, 1
      %p71 = por %p69, %p70
      %p72 = scmp.ne.s32.totalorder %s64, %s67
      %p73 = scmp.eq.s32.totalorder %s16, 0
      %p74 = por %p72, %p73
      %p75 = scmp.ne.s32.totalorder %s64, %s67
      %p76 = scmp.eq.s32.totalorder %s21, 1
      %p77 = por %p75, %p76
      %p78 = scmp.ne.s32.totalorder %s67, %s68
      %p79 = scmp.eq.s32.totalorder %s21, 0
      %p80 = por %p78, %p79
      %p81 = scmp.ne.s32.totalorder %s67, %s68
      %p82 = scmp.eq.s32.totalorder %s22, 1
      %p83 = por %p81, %p82
      %p85 = scmp.ne.s32.totalorder %s68, %s84
      %p86 = scmp.eq.s32.totalorder %s22, 0
      %p87 = por %p85, %p86
      %s89 = sadd.s32 %s88, 1
      %p92 = scmp.eq.s32.totalorder %s16, 1
      %p93 = scmp.ne.s32.totalorder %s88, %s90
      %p94 = scmp.eq.s32.totalorder %s16, 0
      %p95 = por %p93, %p94
      %p96 = scmp.ne.s32.totalorder %s88, %s90
      %p97 = scmp.eq.s32.totalorder %s21, 1
      %p98 = por %p96, %p97
      %p99 = scmp.ne.s32.totalorder %s90, %s91
      %p100 = scmp.eq.s32.totalorder %s21, 0
      %p101 = por %p99, %p100
      %p102 = scmp.ne.s32.totalorder %s90, %s91
      %p103 = scmp.eq.s32.totalorder %s22, 1
      %p104 = por %p102, %p103
      %p106 = scmp.ne.s32.totalorder %s91, %s105
      %p107 = scmp.eq.s32.totalorder %s22, 0
      %p108 = por %p106, %p107
      %s109 = ssub.s32 %s23, %s35
      %p110 = scmp.eq.s32.totalorder %s109, 0
      %s112 = sadd.s32 %s111, 1
      %s113 = scalar_select %p110, %s111, %s112
      %p116 = pneg %p110
      %p117 = scmp.eq.s32.totalorder %s16, 1
      %p118 = por %p116, %p117
      %p119 = scmp.ne.s32.totalorder %s111, %s114
      %p120 = scmp.eq.s32.totalorder %s16, 0
      %p121 = por %p119, %p120
      %p122 = scmp.ne.s32.totalorder %s111, %s114
      %p123 = scmp.eq.s32.totalorder %s21, 1
      %p124 = por %p122, %p123
      %p125 = scmp.ne.s32.totalorder %s114, %s115
      %p126 = scmp.eq.s32.totalorder %s21, 0
      %p127 = por %p125, %p126
      %p128 = scmp.ne.s32.totalorder %s114, %s115
      %p129 = scmp.eq.s32.totalorder %s22, 1
      %p130 = por %p128, %p129
      %p132 = scmp.ne.s32.totalorder %s115, %s131
      %p133 = scmp.eq.s32.totalorder %s22, 0
      %p134 = por %p132, %p133
      %p135 = scmp.le.s32.totalorder 1, %s16
      %p136 = scmp.lt.s32.totalorder %s16, 3
      %p137 = pnand %p135, %p136
      %p138 = pneg %p137
      // Predicated region
      $region9: #{tpu_custom_call.1} parent=5 // pred_check
        _
      $region10: #{tpu_custom_call.1} parent=5 // pred_check_branch
        %140 = sbr.rel (%p137) target = $region12
      $region11: #{tpu_custom_call.1} parent=5 // pred_region
        %s141 = ssub.s32 %s16, 1
        // Predicated region
        $region13: #{tpu_custom_call.1} parent=11 // pred_check
          %p142 = pneg %p80
        $region14: #{tpu_custom_call.1} parent=11 // pred_check_branch
          %144 = sbr.rel (%p142) target = $region16
        $region15: #{tpu_custom_call.1} parent=11 // pred_region
          %s145 = smul.u32 8, %s26
          %s147 = ssub.s32 1024, 1024
          %148 = vsyncadd [#allocation7], %s147
          %s149 = smul.addr %s145, 128
          %s150 = scalar_lea.hbm %s1, %s149
          %s151 = sshll.u32 [#allocation6], 4
          %s152 = int_to_ptr.vmem [resolvable:$true] %s151
          %157 = dma.hbm_to_vmem [thread:$0]  %s150, 1024, %s152, [#allocation7], 128, 128, 8
        $region16: #{tpu_custom_call.1} parent=11 // pred_fallthru
          _
        // Predicated region
        $region17: #{tpu_custom_call.1} parent=11 // pred_check
          %p158 = pneg %p101
        $region18: #{tpu_custom_call.1} parent=11 // pred_check_branch
          %160 = sbr.rel (%p158) target = $region20
        $region19: #{tpu_custom_call.1} parent=11 // pred_region
          %s162 = ssub.s32 128, 128
          %163 = vsyncadd [#allocation7], %s162
          %s165 = sshll.u32 [#allocation8], 4
          %s166 = int_to_ptr.vmem [resolvable:$true] %s165
          %168 = dma.hbm_to_vmem [thread:$0]  %s2, 128, %s166, [#allocation7]
        $region20: #{tpu_custom_call.1} parent=11 // pred_fallthru
          _
      $region12: #{tpu_custom_call.1} parent=5 // pred_fallthru
        _
      %p169 = scmp.lt.s32.totalorder %s16, 2
      // Predicated region
      $region21: #{tpu_custom_call.1} parent=5 // pred_check
        %p170 = pneg %p169
      $region22: #{tpu_custom_call.1} parent=5 // pred_check_branch
        %172 = sbr.rel (%p170) target = $region24
      $region23: #{tpu_custom_call.1} parent=5 // pred_region
        // Predicated region
        $region25: #{tpu_custom_call.1} parent=23 // pred_check
          %p173 = pneg %p48
        $region26: #{tpu_custom_call.1} parent=23 // pred_check_branch
          %175 = sbr.rel (%p173) target = $region28
        $region27: #{tpu_custom_call.1} parent=23 // pred_region
          %s176 = sand.u32 %s38, 1
          %s177 = scalar_lea.sflag [#allocation4], %s176
          %s178 = sand.u32 %s38, 1
          %s179 = scalar_lea.vmem [#allocation3], %s178
          %s181 = ssub.s32 16, 16
          %182 = vsyncadd %s177, %s181
          %s183 = smul.addr %s23, 16
          %s184 = scalar_lea.hbm %s0, %s183
          %s186 = sshll.u32 %s179, 4
          %s187 = int_to_ptr.vmem [resolvable:$true] %s186
          %189 = dma.hbm_to_vmem [thread:$0]  %s184, 16, %s187, %s177
        $region28: #{tpu_custom_call.1} parent=23 // pred_fallthru
          _
      $region24: #{tpu_custom_call.1} parent=5 // pred_fallthru
        _
      %p190 = scmp.le.s32.totalorder 1, %s16
      %p191 = scmp.lt.s32.totalorder %s16, 3
      %p192 = pnand %p190, %p191
      %p193 = pneg %p192
      // Predicated region
      $region29: #{tpu_custom_call.1} parent=5 // pred_check
        _
      $region30: #{tpu_custom_call.1} parent=5 // pred_check_branch
        %195 = sbr.rel (%p192) target = $region32
      $region31: #{tpu_custom_call.1} parent=5 // pred_region
        %s196 = ssub.s32 %s16, 1
        %s197 = sand.u32 %s41, 1
        %s198 = scalar_lea.sflag [#allocation4], %s197
        %s199 = sand.u32 %s41, 1
        %s200 = scalar_lea.vmem [#allocation3], %s199
        // Predicated region
        $region33: #{tpu_custom_call.1} parent=31 // pred_check
          %p201 = pneg %p54
        $region34: #{tpu_custom_call.1} parent=31 // pred_check_branch
          %203 = sbr.rel (%p201) target = $region36
        $region35: #{tpu_custom_call.1} parent=31 // pred_region
          %204 = dma.done %s198, 16
        $region36: #{tpu_custom_call.1} parent=31 // pred_fallthru
          _
        // Predicated region
        $region37: #{tpu_custom_call.1} parent=31 // pred_check
          %p205 = pneg %p80
        $region38: #{tpu_custom_call.1} parent=31 // pred_check_branch
          %207 = sbr.rel (%p205) target = $region40
        $region39: #{tpu_custom_call.1} parent=31 // pred_region
          %208 = dma.done [#allocation7], 1024
        $region40: #{tpu_custom_call.1} parent=31 // pred_fallthru
          _
        // Predicated region
        $region41: #{tpu_custom_call.1} parent=31 // pred_check
          %p209 = pneg %p101
        $region42: #{tpu_custom_call.1} parent=31 // pred_check_branch
          %211 = sbr.rel (%p209) target = $region44
        $region43: #{tpu_custom_call.1} parent=31 // pred_region
          %212 = dma.done [#allocation7], 128
        $region44: #{tpu_custom_call.1} parent=31 // pred_fallthru
          _
        %s213 = sand.u32 %s41, 1
        %s214 = scalar_lea.sflag [#allocation4], %s213
        %s215 = sand.u32 %s41, 1
        %s216 = scalar_lea.vmem [#allocation3], %s215
        %p217 = pneg %p54
        %p218 = pneg %p51
        %p219 = pneg %p80
        %p220 = pneg %p77
        %p221 = pneg %p101
        %p222 = pneg %p98
        %p223 = pneg %p127
        %p224 = pneg %p124
        %s225 = sand.u32 %s114, 1
        %s226 = scalar_lea.sflag [#allocation5], %s225
        %s227 = sand.u32 %s114, 1
        %s228 = smul.addr %s227, 16
        %s229 = scalar_lea.vmem [#allocation9], %s228
        %s230 = smul.u32 8, %s26
        %p231 = scmp.eq.s32.totalorder %s26, 0
        // Predicated region
        $region45: #{tpu_custom_call.1} parent=31 // pred_check
          %p232 = pneg %p231
        $region46: #{tpu_custom_call.1} parent=31 // pred_check_branch
          %234 = sbr.rel (%p232) target = $region48
        $region47: #{tpu_custom_call.1} parent=31 // pred_region
          %235 = vst [vmem:[#allocation2] sm:$0xff] 0.0
        $region48: #{tpu_custom_call.1} parent=31 // pred_fallthru
          _
        %v236 = vld [vmem:[%s200] sm:$0x1]
        %v237 = vlaneseq
        %v238 = vshrl.u32 %v237, 7
        %v239 = vadd.s32 %v238, 8
        %v240 = vadd.s32 %v238, 16
        %v241 = vadd.s32 %v238, 24
        %v242 = vadd.s32 %v238, 32
        %v243 = vadd.s32 %v238, 40
        %v244 = vadd.s32 %v238, 48
        %v245 = vadd.s32 %v238, 56
        %s246 = smul.u32 %s26, 64
        %v247 = vstv %s246
        %v248 = vadd.s32 %v238, %v247
        %v249 = vadd.s32 %v239, %v247
        %v250 = vadd.s32 %v240, %v247
        %v251 = vadd.s32 %v241, %v247
        %v252 = vadd.s32 %v242, %v247
        %v253 = vadd.s32 %v243, %v247
        %v254 = vadd.s32 %v244, %v247
        %v255 = vadd.s32 %v245, %v247
        %v256 = vlaneseq
        %v257 = vshrl.u32 %v256, 7
        %v258 = vsub.s32 0, %v257
        %v259 = vrot.slane %v236, %v258
        %vm260 = vcmp.eq.s32.totalorder %v248, %v259
        %vm261 = vcmp.eq.s32.totalorder %v249, %v259
        %vm262 = vcmp.eq.s32.totalorder %v250, %v259
        %vm263 = vcmp.eq.s32.totalorder %v251, %v259
        %vm264 = vcmp.eq.s32.totalorder %v252, %v259
        %vm265 = vcmp.eq.s32.totalorder %v253, %v259
        %vm266 = vcmp.eq.s32.totalorder %v254, %v259
        %vm267 = vcmp.eq.s32.totalorder %v255, %v259
        %v268 = vsel %vm260, 1, 0
        %v269 = vsel %vm261, 1, 0
        %v270 = vsel %vm262, 1, 0
        %v271 = vsel %vm263, 1, 0
        %v272 = vsel %vm264, 1, 0
        %v273 = vsel %vm265, 1, 0
        %v274 = vsel %vm266, 1, 0
        %v275 = vsel %vm267, 1, 0
        %v276 = vcvt.s32.f32 %v268
        %v277 = vcvt.s32.f32 %v269
        %v278 = vcvt.s32.f32 %v270
        %v279 = vcvt.s32.f32 %v271
        %v280 = vcvt.s32.f32 %v272
        %v281 = vcvt.s32.f32 %v273
        %v282 = vcvt.s32.f32 %v274
        %v283 = vcvt.s32.f32 %v275
        %v284 = vld [vmem:[#allocation2] sm:$0xff]
        %v285 = vld [vmem:[#allocation6] sm:$0xff]
        %v286 = vld [vmem:[#allocation6 + $0x8] sm:$0xff]
        %v287 = vld [vmem:[#allocation6 + $0x10] sm:$0xff]
        %v288 = vld [vmem:[#allocation6 + $0x18] sm:$0xff]
        %v289 = vld [vmem:[#allocation6 + $0x20] sm:$0xff]
        %v290 = vld [vmem:[#allocation6 + $0x28] sm:$0xff]
        %v291 = vld [vmem:[#allocation6 + $0x30] sm:$0xff]
        %v292 = vld [vmem:[#allocation6 + $0x38] sm:$0xff]
        %293 = vxpose.xlu0.b32.start [1/16] %v276, 128
        %294 = vxpose.xlu0.b32.cont [2/16] %v277, 128
        %295 = vxpose.xlu0.b32.cont [3/16] %v278, 128
        %296 = vxpose.xlu0.b32.cont [4/16] %v279, 128
        %297 = vxpose.xlu0.b32.cont [5/16] %v280, 128
        %298 = vxpose.xlu0.b32.cont [6/16] %v281, 128
        %299 = vxpose.xlu0.b32.cont [7/16] %v282, 128
        %300 = vxpose.xlu0.b32.cont [8/16] %v283, 128
        %301 = vxpose.xlu0.b32.cont [9/16] 0.0, 128
        %302 = vxpose.xlu0.b32.cont [10/16] 0.0, 128
        %303 = vxpose.xlu0.b32.cont [11/16] 0.0, 128
        %304 = vxpose.xlu0.b32.cont [12/16] 0.0, 128
        %305 = vxpose.xlu0.b32.cont [13/16] 0.0, 128
        %306 = vxpose.xlu0.b32.cont [14/16] 0.0, 128
        %307 = vxpose.xlu0.b32.cont [15/16] 0.0, 128
        %308 = vxpose.xlu0.b32.end [16/16] 0.0, 128
        %v309 = vpop.trf.xlu0
        %v310 = vpop.trf.xlu0
        %v311 = vpop.trf.xlu0
        %v312 = vpop.trf.xlu0
        %v313 = vpop.trf.xlu0
        %v314 = vpop.trf.xlu0
        %v315 = vpop.trf.xlu0
        %v316 = vpop.trf.xlu0
        %v317 = vpop.trf.xlu0
        %v318 = vpop.trf.xlu0
        %v319 = vpop.trf.xlu0
        %v320 = vpop.trf.xlu0
        %v321 = vpop.trf.xlu0
        %v322 = vpop.trf.xlu0
        %v323 = vpop.trf.xlu0
        %v324 = vpop.trf.xlu0
        %vm325 = vcmask 523264
        %v327 = vsel %vm325, %v309, 0
        %329 = vmatprep.subr.mxu0 0.0
        %330 = vmatpush1.msra.mxu0 %v285
        %331 = vmatprep.subr.mxu0 0.0
        %332 = vmatpush1.msra.mxu0 %v286
        %333 = vmatprep.subr.mxu0 0.0
        %334 = vmatpush1.msra.mxu0 %v287
        %335 = vmatprep.subr.mxu0 0.0
        %336 = vmatpush1.msra.mxu0 %v288
        %337 = vmatprep.subr.mxu0 0.0
        %338 = vmatpush1.msra.mxu0 %v289
        %339 = vmatprep.subr.mxu0 0.0
        %340 = vmatpush1.msra.mxu0 %v290
        %341 = vmatprep.subr.mxu0 0.0
        %342 = vmatpush1.msra.mxu0 %v291
        %343 = vmatprep.subr.mxu0 0.0
        %344 = vmatpush1.msra.mxu0 %v292
        %345 = vmatprep.subr.mxu0 0.0
        %346 = vmatpush1.msra.mxu0 0.0
        %347 = vmatprep.subr.mxu0 0.0
        %348 = vmatpush1.msra.mxu0 0.0
        %349 = vmatprep.subr.mxu0 0.0
        %350 = vmatpush1.msra.mxu0 0.0
        %351 = vmatprep.subr.mxu0 0.0
        %352 = vmatpush1.msra.mxu0 0.0
        %353 = vmatprep.subr.mxu0 0.0
        %354 = vmatpush1.msra.mxu0 0.0
        %355 = vmatprep.subr.mxu0 0.0
        %356 = vmatpush1.msra.mxu0 0.0
        %357 = vmatprep.subr.mxu0 0.0
        %358 = vmatpush1.msra.mxu0 0.0
        %359 = vmatprep.subr.mxu0 0.0
        %360 = vmatpush1.msra.mxu0 0.0
        %361 = vmatprep.subr.mxu0 0.0
        %362 = vmatpush1.msra.mxu0 0.0
        %363 = vmatprep.subr.mxu0 0.0
        %364 = vmatpush1.msra.mxu0 0.0
        %365 = vmatprep.subr.mxu0 0.0
        %366 = vmatpush1.msra.mxu0 0.0
        %367 = vmatprep.subr.mxu0 0.0
        %368 = vmatpush1.msra.mxu0 0.0
        %369 = vmatprep.subr.mxu0 0.0
        %370 = vmatpush1.msra.mxu0 0.0
        %371 = vmatprep.subr.mxu0 0.0
        %372 = vmatpush1.msra.mxu0 0.0
        %373 = vmatprep.subr.mxu0 0.0
        %374 = vmatpush1.msra.mxu0 0.0
        %375 = vmatprep.subr.mxu0 0.0
        %376 = vmatpush1.msra.mxu0 0.0
        %377 = vmatprep.subr.mxu0 0.0
        %378 = vmatpush1.msra.mxu0 0.0
        %379 = vmatprep.subr.mxu0 0.0
        %380 = vmatpush1.msra.mxu0 0.0
        %381 = vmatprep.subr.mxu0 0.0
        %382 = vmatpush1.msra.mxu0 0.0
        %383 = vmatprep.subr.mxu0 0.0
        %384 = vmatpush1.msra.mxu0 0.0
        %385 = vmatprep.subr.mxu0 0.0
        %386 = vmatpush1.msra.mxu0 0.0
        %387 = vmatprep.subr.mxu0 0.0
        %388 = vmatpush1.msra.mxu0 0.0
        %389 = vmatprep.subr.mxu0 0.0
        %390 = vmatpush1.msra.mxu0 0.0
        %391 = vmatprep.subr.mxu0 0.0
        %392 = vmatpush1.msra.mxu0 0.0
        %393 = vmatprep.mubr.f32.mxu0 0.0
        %394 = vmatmul.mubr.f32.gmra.mrb[0].mxu0 %v327
        %v395 = vpop.f32.mrb[0].mxu0
        %v396 = vadd.f32 0.0, %v395
        %v397 = vpop.f32.mrb[0].mxu0
        %398 = vdwg.mxu0
        %v399 = vadd.f32 %v284, %v396
        %400 = vst [vmem:[#allocation2] sm:$0xff] %v399
        // Predicated region
        $region49: #{tpu_custom_call.1} parent=31 // pred_check
          %p401 = pneg %p231
        $region50: #{tpu_custom_call.1} parent=31 // pred_check_branch
          %403 = sbr.rel (%p401) target = $region52
        $region51: #{tpu_custom_call.1} parent=31 // pred_region
          %v404 = vld [vmem:[#allocation2] sm:$0xff]
          %405 = vst [vmem:[%s229] sm:$0xff] %v404
          %v406 = vld [vmem:[#allocation8] sm:$0xff]
          %407 = vst [vmem:[%s229 + $0x8] sm:$0xff] %v406
        $region52: #{tpu_custom_call.1} parent=31 // pred_fallthru
          _
        %s408 = sand.u32 %s114, 1
        %s409 = scalar_lea.sflag [#allocation5], %s408
        %s410 = sand.u32 %s114, 1
        %s411 = smul.addr %s410, 16
        %s412 = scalar_lea.vmem [#allocation9], %s411
        // Predicated region
        $region53: #{tpu_custom_call.1} parent=31 // pred_check
          %p413 = pneg %p124
        $region54: #{tpu_custom_call.1} parent=31 // pred_check_branch
          %415 = sbr.rel (%p413) target = $region56
        $region55: #{tpu_custom_call.1} parent=31 // pred_region
          %s417 = ssub.s32 256, 256
          %418 = vsyncadd %s409, %s417
          %s419 = smul.addr %s25, 2
          %s420 = smul.addr %s419, 128
          %s421 = scalar_lea.hbm %s3, %s420
          %s422 = sshll.u32 %s412, 4
          %s423 = int_to_ptr.vmem [resolvable:$true] %s422
          %428 = dma.vmem_to_hbm [thread:$0]  %s423, 256, %s421, %s409, 128, 128, 8
        $region56: #{tpu_custom_call.1} parent=31 // pred_fallthru
          _
      $region32: #{tpu_custom_call.1} parent=5 // pred_fallthru
        _
      %p429 = scmp.le.s32.totalorder 2, %s16
      // Predicated region
      $region57: #{tpu_custom_call.1} parent=5 // pred_check
        %p430 = pneg %p429
      $region58: #{tpu_custom_call.1} parent=5 // pred_check_branch
        %432 = sbr.rel (%p430) target = $region60
      $region59: #{tpu_custom_call.1} parent=5 // pred_region
        %s433 = ssub.s32 %s16, 2
        // Predicated region
        $region61: #{tpu_custom_call.1} parent=59 // pred_check
          %p434 = pneg %p130
        $region62: #{tpu_custom_call.1} parent=59 // pred_check_branch
          %436 = sbr.rel (%p434) target = $region64
        $region63: #{tpu_custom_call.1} parent=59 // pred_region
          %s437 = sand.u32 %s115, 1
          %s438 = scalar_lea.sflag [#allocation5], %s437
          %s439 = sand.u32 %s115, 1
          %s440 = smul.addr %s439, 16
          %s441 = scalar_lea.vmem [#allocation9], %s440
          %442 = dma.done %s438, 256
        $region64: #{tpu_custom_call.1} parent=59 // pred_fallthru
          _
      $region60: #{tpu_custom_call.1} parent=5 // pred_fallthru
        _
    $region6: #{tpu_custom_call.1} parent=1 // loop_footer
      %s20 = sadd.s32 1, %s16
    $region7: #{tpu_custom_call.1} parent=1 // loop_footer_branch
      %15 = sbr.rel target = $region3
    $region8: #{tpu_custom_call.1} parent=1 // loop_exit
      _
    %443 = vsyncpa [#allocation4], 1
    %s444 = scalar_lea.sflag [#allocation4], 1
    %445 = vsyncpa %s444, 1
    %446 = vsyncpa [#allocation7], 1
    %447 = vsyncpa [#allocation5], 1
    %s448 = scalar_lea.sflag [#allocation5], 1
    %449 = vsyncpa %s448, 1

</llo_original>
